<compile_context>
chip_gen: v7x
topology: tpu7x:2x2x1
jax: 0.10.0
libtpu: 0.0.40
codegen_flags: <defaults>
</compile_context>

<pallas_src>
import functools

import jax
import jax.numpy as jnp
from jax.experimental import pallas as pl
from jax.experimental.pallas import tpu as pltpu


def _stats_kernel(seq_ref, out_ref, sum_ref, sq_ref, min_ref, max_ref, *, inv_t):
    """Grid = (B tiles, D tiles, T tiles); T (last, 'arbitrary') is the reduction."""
    k = pl.program_id(2)
    nk = pl.num_programs(2)

    seq = seq_ref[...]                       # (bb, bt, bd), input dtype
    seq32 = seq.astype(jnp.float32)          # promoted only for sum / sumsq

    blk_min = jnp.min(seq, axis=1)           # stay in input dtype (no f32 cast)
    blk_max = jnp.max(seq, axis=1)
    blk_sum = jnp.sum(seq32, axis=1)
    blk_sq = jnp.sum(seq32 * seq32, axis=1)

    @pl.when(k == 0)
    def _init():
        sum_ref[...] = blk_sum
        sq_ref[...] = blk_sq
        min_ref[...] = blk_min
        max_ref[...] = blk_max

    @pl.when(k > 0)
    def _accum():
        sum_ref[...] += blk_sum
        sq_ref[...] += blk_sq
        min_ref[...] = jnp.minimum(min_ref[...], blk_min)
        max_ref[...] = jnp.maximum(max_ref[...], blk_max)

    @pl.when(k == nk - 1)
    def _finalize():
        mean = sum_ref[...] * inv_t
        # One-pass variance; clamp >= 0 to guard against cancellation.
        var = jnp.maximum(sq_ref[...] * inv_t - mean * mean, 0.0)
        std = jnp.sqrt(var)
        od = out_ref.dtype
        # Stat-major block (5, bb, bd): each store is a dense (bb, bd) slab.
        out_ref[0, :, :] = seq[:, seq.shape[1] - 1, :].astype(od)  # global seq[:, -1, :]
        out_ref[1, :, :] = min_ref[...].astype(od)
        out_ref[2, :, :] = max_ref[...].astype(od)
        out_ref[3, :, :] = mean.astype(od)
        out_ref[4, :, :] = std.astype(od)


def _pick_batch_block(b, target=8):
    """bb must be a multiple of 8 (sublane-dense stat-major output block) or
    equal B.  Prefer the largest aligned divisor <= target that still leaves
    >= 2 grid steps on the parallel B axis (v7x megacore); else full B."""
    best = b
    for d in range(8, min(target, b // 2) + 1, 8):
        if b % d == 0:
            best = d
    return best


def _pick_lane_block(d, target=512):
    """Lane tile: full D if D is not 128-divisible; else the largest
    multiple-of-128 divisor of D that is <= target (adds a parallel D axis
    and bounds per-block VMEM for big-D models)."""
    if d % 128 != 0:
        return d
    best = 128
    for cand in range(128, min(target, d) + 1, 128):
        if d % cand == 0:
            best = cand
    return best


def _pick_time_block(t, bb, bd, itemsize):
    """Largest divisor of T that is a multiple of the sublane pack and keeps
    the (bb, bt, bd) input block within ~2-4 MiB.  Never silently exceeds the
    budget: if no aligned divisor fits, take the *smallest* aligned divisor;
    only if T has no aligned divisor at all, fall back to a full-extent block
    (the only other guaranteed-legal shape)."""
    sub = max(8, 32 // itemsize)             # 8 f32, 16 bf16, 32 int8/fp8
    # Sub-32-bit inputs get promoted to f32 inside the kernel, so keep their
    # blocks a bit smaller to bound the live f32 temporaries.
    budget = (4 << 20) if itemsize >= 4 else (2 << 20)
    limit = max(sub, budget // max(1, bb * bd * itemsize))
    best_in, best_over = None, None
    for cand in range(sub, t + 1, sub):
        if t % cand == 0:
            if cand <= limit:
                best_in = cand
            elif best_over is None:
                best_over = cand
    if best_in is not None:
        return best_in
    if best_over is not None:
        return best_over
    return t


def stats_model(seq: jax.Array, *, block_b=None, block_t=None, block_d=None) -> jax.Array:
    """Pallas equivalent of StatsModel.forward.

    seq: (B, T, D) float array.
    returns: (B, 5*D) = cat([seq[:, -1, :], min, max, mean, std], axis=1).
    """
    B, T, D = seq.shape
    itemsize = jnp.dtype(seq.dtype).itemsize

    bd = block_d if block_d is not None else _pick_lane_block(D)
    bb = block_b if block_b is not None else _pick_batch_block(B)
    bt = block_t if block_t is not None else _pick_time_block(T, bb, bd, itemsize)
    assert B % bb == 0 and T % bt == 0 and D % bd == 0, \
        "block sizes must tile the input exactly"

    grid = (B // bb, D // bd, T // bt)
    kernel = functools.partial(_stats_kernel, inv_t=1.0 / T)

    out5 = pl.pallas_call(
        kernel,
        out_shape=jax.ShapeDtypeStruct((5, B, D), seq.dtype),
        grid_spec=pltpu.PrefetchScalarGridSpec(
            num_scalar_prefetch=0,
            grid=grid,
            in_specs=[pl.BlockSpec((bb, bt, bd), lambda i, j, k: (i, k, j))],
            out_specs=pl.BlockSpec((5, bb, bd), lambda i, j, k: (0, i, j)),
            scratch_shapes=[
                pltpu.VMEM((bb, bd), jnp.float32),   # running sum (f32)
                pltpu.VMEM((bb, bd), jnp.float32),   # running sum of squares (f32)
                pltpu.VMEM((bb, bd), seq.dtype),     # running min (input dtype)
                pltpu.VMEM((bb, bd), seq.dtype),     # running max (input dtype)
            ],
        ),
        compiler_params=pltpu.CompilerParams(
            dimension_semantics=("parallel", "parallel", "arbitrary"),
            # Explicit scoped-VMEM cap: well above the ~8-14 MiB footprint of
            # double-buffered 2-4 MiB blocks, with headroom under v7x's 64 MiB
            # physical VMEM (v5e/v6e have 128 MiB physical).
            vmem_limit_bytes=48 << 20),
    )(seq)

    # Stat-major (5, B, D) from the kernel -> (B, 5, D) -> (B, 5*D); matches
    # the torch.cat([last, min, max, mean, std], dim=1) layout exactly.
    return jnp.transpose(out5, (1, 0, 2)).reshape(B, 5 * D)


def _stats_ref(seq: jax.Array) -> jax.Array:
    """Pure-JAX reference mirroring the PyTorch forward (unbiased=False)."""
    last = seq[:, -1, :]
    mn = jnp.min(seq, axis=1)
    mx = jnp.max(seq, axis=1)
    mean = jnp.mean(seq, axis=1)
    std = jnp.sqrt(jnp.mean((seq - mean[:, None, :]) ** 2, axis=1))
    return jnp.concatenate([last, mn, mx, mean, std], axis=1)


if __name__ == "__main__":
    # NOTE: these demo shapes are tiny (KB/MB-scale) and launch-overhead
    # bound; they validate correctness, not performance.
    key = jax.random.PRNGKey(0)

    # Case 1: tiny shape, full-extent blocks (single grid step per axis).
    B, T, D = 2, 8, 32
    seq = jax.random.normal(key, (B, T, D), dtype=jnp.float32)
    out = jax.block_until_ready(stats_model(seq))
    ref = _stats_ref(seq)
    assert out.shape == (B, 5 * D), out.shape
    assert jnp.allclose(out, ref, atol=1e-5, rtol=1e-5), \
        float(jnp.max(jnp.abs(out - ref)))

    # Case 2: forced aligned tiles so every grid axis has multiple steps
    # (2 parallel B steps x 2 parallel D steps x 4 streaming T steps) --
    # exercises the accumulator init/accumulate/finalize path.
    B2, T2, D2 = 16, 64, 256
    seq2 = jax.random.normal(jax.random.PRNGKey(1), (B2, T2, D2),
                             dtype=jnp.float32)
    out2 = jax.block_until_ready(
        stats_model(seq2, block_b=8, block_t=16, block_d=128))
    ref2 = _stats_ref(seq2)
    assert out2.shape == (B2, 5 * D2), out2.shape
    assert jnp.allclose(out2, ref2, atol=1e-5, rtol=1e-5), \
        float(jnp.max(jnp.abs(out2 - ref2)))

    # Case 3: default block pickers on a larger, bt-biased shape.
    B3, T3, D3 = 8, 512, 128
    seq3 = jax.random.normal(jax.random.PRNGKey(2), (B3, T3, D3),
                             dtype=jnp.float32)
    out3 = jax.block_until_ready(stats_model(seq3))
    ref3 = _stats_ref(seq3)
    assert jnp.allclose(out3, ref3, atol=1e-4, rtol=1e-4), \
        float(jnp.max(jnp.abs(out3 - ref3)))

    print("KERNEL_OK")
</pallas_src>

<mosaic_0001>
module attributes {stable_mosaic.version = 11 : i64} {
  func.func @_stats_kernel(%arg0: i32, %arg1: i32, %arg2: i32, %arg3: memref<2x8x32xf32, #tpu.memory_space<vmem>>, %arg4: memref<5x2x32xf32, #tpu.memory_space<vmem>>, %arg5: memref<2x32xf32, #tpu.memory_space<vmem>>, %arg6: memref<2x32xf32, #tpu.memory_space<vmem>>, %arg7: memref<2x32xf32, #tpu.memory_space<vmem>>, %arg8: memref<2x32xf32, #tpu.memory_space<vmem>>) attributes {dimension_semantics = [#tpu.dimension_semantics<parallel>, #tpu.dimension_semantics<parallel>, #tpu.dimension_semantics<arbitrary>], iteration_bounds = array<i64: 1, 1, 1>, scalar_prefetch = 0 : i64, scratch_operands = 4 : i64, tpu.core_type = #tpu.core_type<tc>, window_params = [{transform_indices = @transform_0, window_bounds = array<i64: 2, 8, 32>}, {transform_indices = @transform_1, window_bounds = array<i64: 5, 2, 32>}]} {
    %c0 = arith.constant 0 : index
    %c0_0 = arith.constant 0 : index
    %c0_1 = arith.constant 0 : index
    %0 = vector.load %arg3[%c0, %c0_0, %c0_1] : memref<2x8x32xf32, #tpu.memory_space<vmem>>, vector<2x8x32xf32>
    %cst = arith.constant dense<0x7F800000> : vector<2x32xf32>
    %1 = vector.multi_reduction <minimumf>, %0, %cst [1] : vector<2x8x32xf32> to vector<2x32xf32>
    %cst_2 = arith.constant dense<0xFF800000> : vector<2x32xf32>
    %2 = vector.multi_reduction <maximumf>, %0, %cst_2 [1] : vector<2x8x32xf32> to vector<2x32xf32>
    %cst_3 = arith.constant dense<0.000000e+00> : vector<2x32xf32>
    %3 = vector.multi_reduction <add>, %0, %cst_3 [1] : vector<2x8x32xf32> to vector<2x32xf32>
    %4 = arith.mulf %0, %0 : vector<2x8x32xf32>
    %cst_4 = arith.constant dense<0.000000e+00> : vector<2x32xf32>
    %5 = vector.multi_reduction <add>, %4, %cst_4 [1] : vector<2x8x32xf32> to vector<2x32xf32>
    %c0_i32 = arith.constant 0 : i32
    %6 = arith.cmpi eq, %arg2, %c0_i32 : i32
    %7 = arith.extui %6 : i1 to i32
    %c0_i32_5 = arith.constant 0 : i32
    %8 = arith.cmpi ne, %7, %c0_i32_5 : i32
    scf.if %8 {
      %c0_10 = arith.constant 0 : index
      %c0_11 = arith.constant 0 : index
      %15 = vector.load %arg5[%c0_10, %c0_11] : memref<2x32xf32, #tpu.memory_space<vmem>>, vector<2x32xf32>
      tpu.vector_store %arg5[%c0_10, %c0_11], %3 {strides = array<i32>} : memref<2x32xf32, #tpu.memory_space<vmem>>, vector<2x32xf32>,
      %c0_12 = arith.constant 0 : index
      %c0_13 = arith.constant 0 : index
      %16 = vector.load %arg6[%c0_12, %c0_13] : memref<2x32xf32, #tpu.memory_space<vmem>>, vector<2x32xf32>
      tpu.vector_store %arg6[%c0_12, %c0_13], %5 {strides = array<i32>} : memref<2x32xf32, #tpu.memory_space<vmem>>, vector<2x32xf32>,
      %c0_14 = arith.constant 0 : index
      %c0_15 = arith.constant 0 : index
      %17 = vector.load %arg7[%c0_14, %c0_15] : memref<2x32xf32, #tpu.memory_space<vmem>>, vector<2x32xf32>
      tpu.vector_store %arg7[%c0_14, %c0_15], %1 {strides = array<i32>} : memref<2x32xf32, #tpu.memory_space<vmem>>, vector<2x32xf32>,
      %c0_16 = arith.constant 0 : index
      %c0_17 = arith.constant 0 : index
      %18 = vector.load %arg8[%c0_16, %c0_17] : memref<2x32xf32, #tpu.memory_space<vmem>>, vector<2x32xf32>
      tpu.vector_store %arg8[%c0_16, %c0_17], %2 {strides = array<i32>} : memref<2x32xf32, #tpu.memory_space<vmem>>, vector<2x32xf32>,
    } else {
    }
    %c0_i32_6 = arith.constant 0 : i32
    %9 = arith.cmpi sgt, %arg2, %c0_i32_6 : i32
    %10 = arith.extui %9 : i1 to i32
    %c0_i32_7 = arith.constant 0 : i32
    %11 = arith.cmpi ne, %10, %c0_i32_7 : i32
    scf.if %11 {
      %c0_10 = arith.constant 0 : index
      %c0_11 = arith.constant 0 : index
      %15 = vector.load %arg5[%c0_10, %c0_11] : memref<2x32xf32, #tpu.memory_space<vmem>>, vector<2x32xf32>
      %16 = arith.addf %15, %3 : vector<2x32xf32>
      %c0_12 = arith.constant 0 : index
      %c0_13 = arith.constant 0 : index
      %17 = vector.load %arg5[%c0_12, %c0_13] : memref<2x32xf32, #tpu.memory_space<vmem>>, vector<2x32xf32>
      tpu.vector_store %arg5[%c0_12, %c0_13], %16 {strides = array<i32>} : memref<2x32xf32, #tpu.memory_space<vmem>>, vector<2x32xf32>,
      %c0_14 = arith.constant 0 : index
      %c0_15 = arith.constant 0 : index
      %18 = vector.load %arg6[%c0_14, %c0_15] : memref<2x32xf32, #tpu.memory_space<vmem>>, vector<2x32xf32>
      %19 = arith.addf %18, %5 : vector<2x32xf32>
      %c0_16 = arith.constant 0 : index
      %c0_17 = arith.constant 0 : index
      %20 = vector.load %arg6[%c0_16, %c0_17] : memref<2x32xf32, #tpu.memory_space<vmem>>, vector<2x32xf32>
      tpu.vector_store %arg6[%c0_16, %c0_17], %19 {strides = array<i32>} : memref<2x32xf32, #tpu.memory_space<vmem>>, vector<2x32xf32>,
      %c0_18 = arith.constant 0 : index
      %c0_19 = arith.constant 0 : index
      %21 = vector.load %arg7[%c0_18, %c0_19] : memref<2x32xf32, #tpu.memory_space<vmem>>, vector<2x32xf32>
      %22 = arith.minimumf %21, %1 : vector<2x32xf32>
      %c0_20 = arith.constant 0 : index
      %c0_21 = arith.constant 0 : index
      %23 = vector.load %arg7[%c0_20, %c0_21] : memref<2x32xf32, #tpu.memory_space<vmem>>, vector<2x32xf32>
      tpu.vector_store %arg7[%c0_20, %c0_21], %22 {strides = array<i32>} : memref<2x32xf32, #tpu.memory_space<vmem>>, vector<2x32xf32>,
      %c0_22 = arith.constant 0 : index
      %c0_23 = arith.constant 0 : index
      %24 = vector.load %arg8[%c0_22, %c0_23] : memref<2x32xf32, #tpu.memory_space<vmem>>, vector<2x32xf32>
      %25 = arith.maximumf %24, %2 : vector<2x32xf32>
      %c0_24 = arith.constant 0 : index
      %c0_25 = arith.constant 0 : index
      %26 = vector.load %arg8[%c0_24, %c0_25] : memref<2x32xf32, #tpu.memory_space<vmem>>, vector<2x32xf32>
      tpu.vector_store %arg8[%c0_24, %c0_25], %25 {strides = array<i32>} : memref<2x32xf32, #tpu.memory_space<vmem>>, vector<2x32xf32>,
    } else {
    }
    %c0_i32_8 = arith.constant 0 : i32
    %12 = arith.cmpi eq, %arg2, %c0_i32_8 : i32
    %13 = arith.extui %12 : i1 to i32
    %c0_i32_9 = arith.constant 0 : i32
    %14 = arith.cmpi ne, %13, %c0_i32_9 : i32
    scf.if %14 {
      %c0_10 = arith.constant 0 : index
      %c0_11 = arith.constant 0 : index
      %15 = vector.load %arg5[%c0_10, %c0_11] : memref<2x32xf32, #tpu.memory_space<vmem>>, vector<2x32xf32>
      %cst_12 = arith.constant 1.250000e-01 : f32
      %16 = vector.broadcast %cst_12 : f32 to vector<2x32xf32>
      %17 = arith.mulf %15, %16 : vector<2x32xf32>
      %c0_13 = arith.constant 0 : index
      %c0_14 = arith.constant 0 : index
      %18 = vector.load %arg6[%c0_13, %c0_14] : memref<2x32xf32, #tpu.memory_space<vmem>>, vector<2x32xf32>
      %cst_15 = arith.constant 1.250000e-01 : f32
      %19 = vector.broadcast %cst_15 : f32 to vector<2x32xf32>
      %20 = arith.mulf %18, %19 : vector<2x32xf32>
      %21 = arith.mulf %17, %17 : vector<2x32xf32>
      %22 = arith.subf %20, %21 : vector<2x32xf32>
      %cst_16 = arith.constant 0.000000e+00 : f32
      %23 = vector.broadcast %cst_16 : f32 to vector<2x32xf32>
      %24 = arith.maximumf %22, %23 : vector<2x32xf32>
      %25 = math.sqrt %24 : vector<2x32xf32>
      %26 = vector.extract_strided_slice %0 {offsets = [0, 7, 0], sizes = [2, 1, 32], strides = [1, 1, 1]} : vector<2x8x32xf32> to vector<2x1x32xf32>
      %27 = vector.shape_cast %26 : vector<2x1x32xf32> to vector<2x32xf32>
      %c0_17 = arith.constant 0 : index
      %c0_18 = arith.constant 0 : index
      %c0_19 = arith.constant 0 : index
      %28 = vector.load %arg4[%c0_17, %c0_18, %c0_19] : memref<5x2x32xf32, #tpu.memory_space<vmem>>, vector<1x2x32xf32>
      %29 = vector.shape_cast %28 : vector<1x2x32xf32> to vector<2x32xf32>
      %30 = vector.shape_cast %27 : vector<2x32xf32> to vector<1x2x32xf32>
      tpu.vector_store %arg4[%c0_17, %c0_18, %c0_19], %30 {strides = array<i32>} : memref<5x2x32xf32, #tpu.memory_space<vmem>>, vector<1x2x32xf32>,
      %c0_20 = arith.constant 0 : index
      %c0_21 = arith.constant 0 : index
      %31 = vector.load %arg7[%c0_20, %c0_21] : memref<2x32xf32, #tpu.memory_space<vmem>>, vector<2x32xf32>
      %c1 = arith.constant 1 : index
      %c0_22 = arith.constant 0 : index
      %c0_23 = arith.constant 0 : index
      %32 = vector.load %arg4[%c1, %c0_22, %c0_23] : memref<5x2x32xf32, #tpu.memory_space<vmem>>, vector<1x2x32xf32>
      %33 = vector.shape_cast %32 : vector<1x2x32xf32> to vector<2x32xf32>
      %34 = vector.shape_cast %31 : vector<2x32xf32> to vector<1x2x32xf32>
      tpu.vector_store %arg4[%c1, %c0_22, %c0_23], %34 {strides = array<i32>} : memref<5x2x32xf32, #tpu.memory_space<vmem>>, vector<1x2x32xf32>,
      %c0_24 = arith.constant 0 : index
      %c0_25 = arith.constant 0 : index
      %35 = vector.load %arg8[%c0_24, %c0_25] : memref<2x32xf32, #tpu.memory_space<vmem>>, vector<2x32xf32>
      %c2 = arith.constant 2 : index
      %c0_26 = arith.constant 0 : index
      %c0_27 = arith.constant 0 : index
      %36 = vector.load %arg4[%c2, %c0_26, %c0_27] : memref<5x2x32xf32, #tpu.memory_space<vmem>>, vector<1x2x32xf32>
      %37 = vector.shape_cast %36 : vector<1x2x32xf32> to vector<2x32xf32>
      %38 = vector.shape_cast %35 : vector<2x32xf32> to vector<1x2x32xf32>
      tpu.vector_store %arg4[%c2, %c0_26, %c0_27], %38 {strides = array<i32>} : memref<5x2x32xf32, #tpu.memory_space<vmem>>, vector<1x2x32xf32>,
      %c3 = arith.constant 3 : index
      %c0_28 = arith.constant 0 : index
      %c0_29 = arith.constant 0 : index
      %39 = vector.load %arg4[%c3, %c0_28, %c0_29] : memref<5x2x32xf32, #tpu.memory_space<vmem>>, vector<1x2x32xf32>
      %40 = vector.shape_cast %39 : vector<1x2x32xf32> to vector<2x32xf32>
      %41 = vector.shape_cast %17 : vector<2x32xf32> to vector<1x2x32xf32>
      tpu.vector_store %arg4[%c3, %c0_28, %c0_29], %41 {strides = array<i32>} : memref<5x2x32xf32, #tpu.memory_space<vmem>>, vector<1x2x32xf32>,
      %c4 = arith.constant 4 : index
      %c0_30 = arith.constant 0 : index
      %c0_31 = arith.constant 0 : index
      %42 = vector.load %arg4[%c4, %c0_30, %c0_31] : memref<5x2x32xf32, #tpu.memory_space<vmem>>, vector<1x2x32xf32>
      %43 = vector.shape_cast %42 : vector<1x2x32xf32> to vector<2x32xf32>
      %44 = vector.shape_cast %25 : vector<2x32xf32> to vector<1x2x32xf32>
      tpu.vector_store %arg4[%c4, %c0_30, %c0_31], %44 {strides = array<i32>} : memref<5x2x32xf32, #tpu.memory_space<vmem>>, vector<1x2x32xf32>,
    } else {
    }
    return
  }
  func.func @transform_0(%arg0: i32, %arg1: i32, %arg2: i32) -> (i32, i32, i32) {
    %c0_i32 = arith.constant 0 : i32
    return %arg0, %arg2, %arg1 : i32, i32, i32
  }
  func.func @transform_1(%arg0: i32, %arg1: i32, %arg2: i32) -> (i32, i32, i32) {
    %c0_i32 = arith.constant 0 : i32
    %c0_i32_0 = arith.constant 0 : i32
    return %c0_i32, %arg0, %arg1 : i32, i32, i32
  }
}

</mosaic_0001>

<llo_original>
// kernel: tpu_custom_call.1
$region0: #{tpu_custom_call.1}
  #allocation0 [shape = 'u32[]', space=smem, size = 0x4, offset = 0x4, fixed_abs, tag = 'smem constant byte address 0x4 - core index']
  #allocation1 [shape = 'u32[144,128]{1,0:T(1,128)}', space=vmem, size = 0x12000, scoped, tag = 'internal scratch']
  #allocation2 [shape = 'f32[2,32]{1,0:T(2,128)}', space=vmem, size = 0x400, scoped, tag = 'scratch operand']
  #allocation3 [shape = 'f32[2,32]{1,0:T(2,128)}', space=vmem, size = 0x400, scoped, tag = 'scratch operand']
  #allocation4 [shape = 'f32[2,32]{1,0:T(2,128)}', space=vmem, size = 0x400, scoped, tag = 'scratch operand']
  #allocation5 [shape = 'f32[2,32]{1,0:T(2,128)}', space=vmem, size = 0x400, scoped, tag = 'scratch operand']
  %s0 = inlined_call_operand.hbm [shape: f32[2,8,32], index: 0, kind: input, shape index: {}]
  %s1 = inlined_call_operand.hbm [shape: f32[5,2,32], index: 1, kind: output, shape index: {}]
  %s2 = sld [smem:[#allocation0]]
  $region30: #{tpu_custom_call.1} parent=0
    _
  %s4 = ssub.s32 1, %s2
  %s5 = scalar_select 0, %s4, %s2
  $region1: #{tpu_custom_call.1} parent=0
    #allocation6 [shape = 'u8[8192]{0}', space=vmem, size = 0x2000, scoped, tag = 'input window, operand 0, single buffered']
    #allocation7 [shape = 's32[1]{0}', space=sflag, size = 0x4, scoped, tag = 'scoped memory for tpu_custom_call.1']
    #allocation8 [shape = 's32[1]{0}', space=sflag, size = 0x4, scoped, tag = 'scoped memory for tpu_custom_call.1']
    #allocation9 [shape = 'u8[5120]{0}', space=vmem, size = 0x1400, scoped, tag = 'output window, operand 0, single buffered']
    %6 = vsyncpa [#allocation7], 0
    %7 = vsyncpa [#allocation8], 0
    // Predicated region
    $region2: #{tpu_custom_call.1} parent=1 // pred_check
      _
    $region3: #{tpu_custom_call.1} parent=1 // pred_check_branch
      %9 = sbr.rel (0) target = $region5
    $region4: #{tpu_custom_call.1} parent=1 // pred_region
      %s11 = ssub.s32 256, 256
      %12 = vsyncadd [#allocation7], %s11
      %s13 = sshll.u32 [#allocation6], 4
      %s14 = int_to_ptr.vmem [resolvable:$true] %s13
      %19 = dma.hbm_to_vmem [thread:$0]  %s0, 256, %s14, [#allocation7], 128, 128, 8
    $region5: #{tpu_custom_call.1} parent=1 // pred_fallthru
      _
    // Predicated region
    $region6: #{tpu_custom_call.1} parent=1 // pred_check
      _
    $region7: #{tpu_custom_call.1} parent=1 // pred_check_branch
      %21 = sbr.rel (0) target = $region9
    $region8: #{tpu_custom_call.1} parent=1 // pred_region
      %22 = dma.done [#allocation7], 256
    $region9: #{tpu_custom_call.1} parent=1 // pred_fallthru
      _
    %v23 = vld [vmem:[#allocation6] sm:$0xff]
    %v24 = vld [vmem:[#allocation6 + $0x8] sm:$0xff]
    %vm25 = vcmask 261120
    %v26 = vsel %vm25, %v23, inf
    %v27 = vrot.slane %v26, 4
    %v28 = vmin.f32 %v26, %v27
    %v29 = vrot.slane %v28, 2
    %v30 = vmin.f32 %v28, %v29
    %v31 = vrot.slane %v30, 1
    %v32 = vmin.f32 %v30, %v31
    %v33 = vsel %vm25, %v24, inf
    %v34 = vrot.slane %v33, 4
    %v35 = vmin.f32 %v33, %v34
    %v36 = vrot.slane %v35, 2
    %v37 = vmin.f32 %v35, %v36
    %v38 = vrot.slane %v37, 1
    %v39 = vmin.f32 %v37, %v38
    %v40 = vsel %vm25, %v23, -inf
    %v41 = vrot.slane %v40, 4
    %v42 = vmax.f32 %v40, %v41
    %v43 = vrot.slane %v42, 2
    %v44 = vmax.f32 %v42, %v43
    %v45 = vrot.slane %v44, 1
    %v46 = vmax.f32 %v44, %v45
    %v47 = vsel %vm25, %v24, -inf
    %v48 = vrot.slane %v47, 4
    %v49 = vmax.f32 %v47, %v48
    %v50 = vrot.slane %v49, 2
    %v51 = vmax.f32 %v49, %v50
    %v52 = vrot.slane %v51, 1
    %v53 = vmax.f32 %v51, %v52
    %v54 = vsel %vm25, %v23, 0.0
    %v55 = vrot.slane %v54, 4
    %v56 = vadd.f32 %v54, %v55
    %v57 = vrot.slane %v56, 2
    %v58 = vadd.f32 %v56, %v57
    %v59 = vrot.slane %v58, 1
    %v60 = vadd.f32 %v58, %v59
    %v61 = vsel %vm25, %v24, 0.0
    %v62 = vrot.slane %v61, 4
    %v63 = vadd.f32 %v61, %v62
    %v64 = vrot.slane %v63, 2
    %v65 = vadd.f32 %v63, %v64
    %v66 = vrot.slane %v65, 1
    %v67 = vadd.f32 %v65, %v66
    %v68 = vmul.f32 %v23, %v23
    %v69 = vmul.f32 %v24, %v24
    %v70 = vsel %vm25, %v68, 0.0
    %v71 = vrot.slane %v70, 4
    %v72 = vadd.f32 %v70, %v71
    %v73 = vrot.slane %v72, 2
    %v74 = vadd.f32 %v72, %v73
    %v75 = vrot.slane %v74, 1
    %v76 = vadd.f32 %v74, %v75
    %v77 = vsel %vm25, %v69, 0.0
    %v78 = vrot.slane %v77, 4
    %v79 = vadd.f32 %v77, %v78
    %v80 = vrot.slane %v79, 2
    %v81 = vadd.f32 %v79, %v80
    %v82 = vrot.slane %v81, 1
    %v83 = vadd.f32 %v81, %v82
    %p84 = scmp.eq.s32.totalorder 0, 0
    // Predicated region
    $region10: #{tpu_custom_call.1} parent=1 // pred_check
      %p85 = pneg %p84
    $region11: #{tpu_custom_call.1} parent=1 // pred_check_branch
      %87 = sbr.rel (%p85) target = $region13
    $region12: #{tpu_custom_call.1} parent=1 // pred_region
      %vm90 = vcmask 1041409
      %v91 = vsel %vm90, %v67, %v60
      %vm93 = vcmask 254976
      %94 = vst.msk [vmem:[#allocation2] sm:$0x3] %vm93, %v91
      %v97 = vsel %vm90, %v83, %v76
      %99 = vst.msk [vmem:[#allocation3] sm:$0x3] %vm93, %v97
      %v102 = vsel %vm90, %v39, %v32
      %104 = vst.msk [vmem:[#allocation4] sm:$0x3] %vm93, %v102
      %v107 = vsel %vm90, %v53, %v46
      %109 = vst.msk [vmem:[#allocation5] sm:$0x3] %vm93, %v107
    $region13: #{tpu_custom_call.1} parent=1 // pred_fallthru
      _
    %p110 = scmp.gt.s32.totalorder 0, 0
    // Predicated region
    $region14: #{tpu_custom_call.1} parent=1 // pred_check
      %p111 = pneg %p110
    $region15: #{tpu_custom_call.1} parent=1 // pred_check_branch
      %113 = sbr.rel (%p111) target = $region17
    $region16: #{tpu_custom_call.1} parent=1 // pred_region
      %v114 = vld [vmem:[#allocation2] sm:$0x3]
      %vm117 = vcmask 1041409
      %v118 = vsel %vm117, %v67, %v60
      %v120 = vadd.f32 %v114, %v118
      %vm121 = vcmask 254976
      %122 = vst.msk [vmem:[#allocation2] sm:$0x3] %vm121, %v120
      %v123 = vld [vmem:[#allocation3] sm:$0x3]
      %v126 = vsel %vm117, %v83, %v76
      %v128 = vadd.f32 %v123, %v126
      %129 = vst.msk [vmem:[#allocation3] sm:$0x3] %vm121, %v128
      %v130 = vld [vmem:[#allocation4] sm:$0x3]
      %v133 = vsel %vm117, %v39, %v32
      %v135 = vmin.f32 %v130, %v133
      %136 = vst.msk [vmem:[#allocation4] sm:$0x3] %vm121, %v135
      %v137 = vld [vmem:[#allocation5] sm:$0x3]
      %v140 = vsel %vm117, %v53, %v46
      %v142 = vmax.f32 %v137, %v140
      %143 = vst.msk [vmem:[#allocation5] sm:$0x3] %vm121, %v142
    $region17: #{tpu_custom_call.1} parent=1 // pred_fallthru
      _
    // Predicated region
    $region18: #{tpu_custom_call.1} parent=1 // pred_check
      %p144 = pneg %p84
    $region19: #{tpu_custom_call.1} parent=1 // pred_check_branch
      %146 = sbr.rel (%p144) target = $region21
    $region20: #{tpu_custom_call.1} parent=1 // pred_region
      %v147 = vld [vmem:[#allocation2] sm:$0x3]
      %v148 = vmul.f32 %v147, 0.125
      %v149 = vld [vmem:[#allocation3] sm:$0x3]
      %v150 = vmul.f32 %v149, 0.125
      %v151 = vmul.f32 %v148, %v148
      %v152 = vsub.f32 %v150, %v151
      %v153 = vmax.f32 %v152, 0.0
      %v154 = vrsqrt.pop %v153
      %v155 = vmul.f32 %v153, %v154
      %vm156 = vcmp.eq.f32.partialorder %v153, inf
      %v157 = vsel %vm156, %v153, %v155
      %vm158 = vcmp.eq.f32.partialorder %v153, 0.0
      %v159 = vand.u32 %v153, 2147483648
      %v160 = vsel %vm158, %v159, %v157
      %v163 = vrot.slane %v24, 7
      %vm166 = vcmask 261127
      %167 = vst.msk [vmem:[#allocation9 - $0x7] sm:$0x80] %vm166, %v23
      %vm168 = vcmask 253952
      %169 = vst.msk [vmem:[#allocation9 + $0x1] sm:$0x1] %vm168, %v163
      %v170 = vld [vmem:[#allocation4] sm:$0x3]
      %s171 = scalar_lea.vmem [#allocation9], 2
      %vm172 = vcmask 254976
      %173 = vst.msk [vmem:[%s171] sm:$0x3] %vm172, %v170
      %v174 = vld [vmem:[#allocation5] sm:$0x3]
      %s175 = scalar_lea.vmem [#allocation9], 4
      %176 = vst.msk [vmem:[%s175] sm:$0x3] %vm172, %v174
      %s177 = scalar_lea.vmem [#allocation9], 6
      %178 = vst.msk [vmem:[%s177] sm:$0x3] %vm172, %v148
      %s179 = scalar_lea.vmem [#allocation9], 8
      %180 = vst.msk [vmem:[%s179] sm:$0x3] %vm172, %v160
    $region21: #{tpu_custom_call.1} parent=1 // pred_fallthru
      _
    // Predicated region
    $region22: #{tpu_custom_call.1} parent=1 // pred_check
      _
    $region23: #{tpu_custom_call.1} parent=1 // pred_check_branch
      %182 = sbr.rel (0) target = $region25
    $region24: #{tpu_custom_call.1} parent=1 // pred_region
      %s184 = ssub.s32 160, 160
      %185 = vsyncadd [#allocation8], %s184
      %s186 = sshll.u32 [#allocation9], 4
      %s187 = int_to_ptr.vmem [resolvable:$true] %s186
      %192 = dma.vmem_to_hbm [thread:$0]  %s187, 160, %s1, [#allocation8], 32, 32, 2
    $region25: #{tpu_custom_call.1} parent=1 // pred_fallthru
      _
    // Predicated region
    $region26: #{tpu_custom_call.1} parent=1 // pred_check
      _
    $region27: #{tpu_custom_call.1} parent=1 // pred_check_branch
      %194 = sbr.rel (0) target = $region29
    $region28: #{tpu_custom_call.1} parent=1 // pred_region
      %195 = dma.done [#allocation8], 160
    $region29: #{tpu_custom_call.1} parent=1 // pred_fallthru
      _
    %196 = vsyncpa [#allocation7], 1
    %197 = vsyncpa [#allocation8], 1

</llo_original>
